<compile_context>
chip_gen: v7x
topology: tpu7x:2x2x1
jax: 0.10.0
libtpu: 0.0.40
codegen_flags: <defaults>
</compile_context>

<pallas_src>
import jax
import jax.numpy as jnp
from jax.experimental import pallas as pl
from jax.experimental.pallas import tpu as pltpu


# ----------------------------- helpers --------------------------------------

def _round_up(x, m):
    return ((x + m - 1) // m) * m


def _sublane(itemsize):
    # minimum second-minor (sublane) tile per element width
    return {1: 32, 2: 16, 4: 8}.get(int(itemsize), 8)


def _tpu_kind():
    try:
        return jax.devices()[0].device_kind.lower()
    except Exception:  # pragma: no cover - defensive
        return ""


def _vmem_budget_bytes():
    """(tile budget, vmem_limit cap) per TPU generation."""
    kind = _tpu_kind()
    if "v7" in kind:
        # 64 MiB physical VMEM per TensorCore, 32 MiB scoped default.
        return 28 * 1024 * 1024, 40 * 1024 * 1024
    if any(tag in kind for tag in ("v5 lite", "v5e", "v6", "trillium")):
        # 128 MiB physical VMEM.
        return 64 * 1024 * 1024, 100 * 1024 * 1024
    # Unknown / future generation: be conservative (v7x-like).
    return 24 * 1024 * 1024, 40 * 1024 * 1024


# ----------------------------- kernel ---------------------------------------

def _patch_embed_kernel(x_ref, w_ref, b_ref, o_ref):
    # x_ref: (tm, K) streamed patch rows (stream dtype)
    # w_ref: (K, N)  VMEM-resident projection weight (stream dtype)
    # b_ref: (1, N)  VMEM-resident bias (f32)
    # o_ref: (tm, N) output tile (out dtype)
    acc = jnp.dot(x_ref[...], w_ref[...], preferred_element_type=jnp.float32)
    o_ref[...] = (acc + b_ref[...]).astype(o_ref.dtype)


# ----------------------------- wrapper --------------------------------------

def patch_embed_forward(x, weight, bias, patch_size, *,
                        io_dtype=jnp.bfloat16, out_dtype=None, tile_m=None):
    """Forward pass of PatchEmbed (Conv2d stride=p kernel=p + flatten, norm=Identity).

    Args:
      x:      (B, C, H, W)  NCHW input (PyTorch convention).
      weight: (embed_dim, C, p, p)  conv weight (OIHW).
      bias:   (embed_dim,)          conv bias.
      patch_size: int p.
      io_dtype: dtype used to STREAM the patch rows and the weight through the
        HBM-bound matmul (default bf16; accumulation and bias add stay f32).
        Pass None for exact f32 parity with the PyTorch module.
      out_dtype: output dtype; defaults to io_dtype if set, else x.dtype.
      tile_m: optional override for the M row tile (rounded to the sublane
        alignment); by default sized from the per-generation VMEM budget.

    Returns:
      (out, Hp, Wp) where out has shape (B, Hp*Wp, embed_dim).
    """
    p = int(patch_size)
    B, C, H, W = x.shape
    N = int(weight.shape[0])           # embed_dim
    K = C * p * p                      # flattened patch length (48 by default)

    stream_dtype = jnp.dtype(io_dtype) if io_dtype is not None else jnp.dtype(x.dtype)
    if out_dtype is None:
        out_dtype = stream_dtype if io_dtype is not None else jnp.dtype(x.dtype)
    out_dtype = jnp.dtype(out_dtype)

    # Cast BEFORE pad/transpose/reshape so the XLA extraction fusion reads the
    # f32 input once and writes the (smaller) stream-dtype patch matrix once.
    if x.dtype != stream_dtype:
        x = x.astype(stream_dtype)

    # --- pad so H, W divisible by p (right/bottom, matches F.pad) -----------
    pad_h = (-H) % p
    pad_w = (-W) % p
    if pad_h or pad_w:
        x = jnp.pad(x, ((0, 0), (0, 0), (0, pad_h), (0, pad_w)))
    Hp = (H + pad_h) // p
    Wp = (W + pad_w) // p

    # --- host-side patch extraction -> (M, K) rows (see TODO at top) --------
    patches = x.reshape(B, C, Hp, p, Wp, p)
    patches = jnp.transpose(patches, (0, 2, 4, 1, 3, 5)).reshape(B * Hp * Wp, K)

    # conv weight (O, C, p, p) -> (K, N), matching the patch flattening order.
    # NOTE: K is NOT zero-padded to 128 in HBM (kernel is HBM-bound; VMEM lane
    # padding is free).
    w_mat = weight.reshape(N, K).T.astype(stream_dtype)
    b_mat = bias.reshape(1, N).astype(jnp.float32)   # bias add stays f32

    M = B * Hp * Wp
    in_elt = stream_dtype.itemsize
    out_elt = out_dtype.itemsize
    align = max(_sublane(in_elt), _sublane(out_elt))   # 8 f32 / 16 bf16 rows
    lane = 128

    # --- VMEM budgeting with lane/sublane padding ----------------------------
    Kpad = _round_up(K, lane)          # 48 -> 128 lanes inside VMEM
    Npad = _round_up(N, lane)          # 96 -> 128 lanes inside VMEM
    budget, vmem_cap = _vmem_budget_bytes()

    # VMEM-resident (constant index_map) weight + bias, double-buffer counted.
    resident = (2 * _round_up(K, _sublane(in_elt)) * Npad * in_elt
                + 2 * 8 * Npad * 4)
    headroom = 2 * 1024 * 1024         # compiler-internal scratch slack
    per_row = 2 * Kpad * in_elt + 2 * Npad * out_elt   # dbl-buffered in + out

    tm = max(align, (budget - resident - headroom) // per_row)
    tm = min(tm, 32768)
    if tile_m is not None:
        tm = min(tm, int(tile_m))
    tm = max(align, (tm // align) * align)

    # Keep at least 2 grid steps so ("parallel",) can use both v7x TensorCores.
    M_align = _round_up(M, align)
    tm = min(tm, _round_up(pl.cdiv(M_align, 2), align))
    tm = max(align, (tm // align) * align)

    grid_m = pl.cdiv(M_align, tm)
    M_pad = grid_m * tm                # every grid step gets a full block
    if M_pad != M:
        patches = jnp.pad(patches, ((0, M_pad - M), (0, 0)))

    vmem_needed = per_row * tm + resident + headroom
    vmem_limit = int(min(vmem_cap, max(16 * 1024 * 1024, int(vmem_needed * 1.25))))

    cost = pl.CostEstimate(
        flops=2 * M * K * N,
        bytes_accessed=(M * K * in_elt + K * N * in_elt
                        + M * N * out_elt + N * 4),
        transcendentals=0,
    )

    out_flat = pl.pallas_call(
        _patch_embed_kernel,
        out_shape=jax.ShapeDtypeStruct((M_pad, N), out_dtype),
        grid_spec=pltpu.PrefetchScalarGridSpec(
            num_scalar_prefetch=0,
            grid=(grid_m,),
            in_specs=[
                pl.BlockSpec((tm, K), lambda i: (i, 0)),   # streamed row tiles
                pl.BlockSpec((K, N), lambda i: (0, 0)),    # weight: VMEM-resident
                pl.BlockSpec((1, N), lambda i: (0, 0)),    # bias:   VMEM-resident
            ],
            out_specs=pl.BlockSpec((tm, N), lambda i: (i, 0)),
        ),
        compiler_params=pltpu.CompilerParams(
            dimension_semantics=("parallel",),   # shard M tiles across TCs (v7x)
            vmem_limit_bytes=vmem_limit,
        ),
        cost_estimate=cost,
    )(patches, w_mat, b_mat)

    out = out_flat[:M].reshape(B, Hp * Wp, N)
    # norm_layer is None -> nn.Identity()
    return out, Hp, Wp


# ----------------------------- demo / check ---------------------------------

if __name__ == "__main__":
    # Small shapes consistent with the module defaults:
    # patch_size=4, in_c=3, embed_dim=96.
    patch_size = 4
    in_c = 3
    embed_dim = 96
    B, H, W = 2, 16, 16

    key = jax.random.PRNGKey(0)
    kx, kw, kb = jax.random.split(key, 3)
    x = jax.random.normal(kx, (B, in_c, H, W), dtype=jnp.float32)
    weight = jax.random.normal(kw, (embed_dim, in_c, patch_size, patch_size),
                               dtype=jnp.float32) * 0.02
    bias = jax.random.normal(kb, (embed_dim,), dtype=jnp.float32) * 0.02

    # Pure-JAX reference (strided conv == patch matmul), f32.
    ref = jax.lax.conv_general_dilated(
        x, weight, window_strides=(patch_size, patch_size), padding="VALID",
        dimension_numbers=("NCHW", "OIHW", "NCHW"))
    ref = ref + bias[None, :, None, None]
    Hp_ref, Wp_ref = H // patch_size, W // patch_size
    ref = ref.reshape(B, embed_dim, Hp_ref * Wp_ref).transpose(0, 2, 1)

    # 1) exact-parity f32 path (io_dtype=None).
    out32, Hp, Wp = patch_embed_forward(x, weight, bias, patch_size, io_dtype=None)
    jax.block_until_ready(out32)
    assert out32.shape == (B, Hp * Wp, embed_dim)
    assert out32.dtype == x.dtype
    assert Hp == Hp_ref and Wp == Wp_ref
    assert jnp.allclose(out32, ref, atol=1e-4, rtol=1e-4)

    # 2) default bf16-streaming path (f32 accumulation inside the kernel).
    out16, Hp, Wp = patch_embed_forward(x, weight, bias, patch_size)
    jax.block_until_ready(out16)
    assert out16.shape == (B, Hp * Wp, embed_dim)
    assert out16.dtype == jnp.bfloat16
    assert Hp == Hp_ref and Wp == Wp_ref
    assert jnp.allclose(out16.astype(jnp.float32), ref, atol=5e-2, rtol=5e-2)

    print("KERNEL_OK")
</pallas_src>

<mosaic_0001>
module attributes {stable_mosaic.version = 11 : i64} {
  func.func @_patch_embed_kernel(%arg0: i32, %arg1: memref<16x48xf32, #tpu.memory_space<vmem>>, %arg2: memref<48x96xf32, #tpu.memory_space<vmem>>, %arg3: memref<1x96xf32, #tpu.memory_space<vmem>>, %arg4: memref<16x96xf32, #tpu.memory_space<vmem>>) attributes {dimension_semantics = [#tpu.dimension_semantics<parallel>], iteration_bounds = array<i64: 2>, scalar_prefetch = 0 : i64, scratch_operands = 0 : i64, tpu.core_type = #tpu.core_type<tc>, window_params = [{transform_indices = @transform_0, window_bounds = array<i64: 16, 48>}, {pipeline_mode = #tpu.pipeline_mode<synchronous>, transform_indices = @transform_1, window_bounds = array<i64: 48, 96>}, {pipeline_mode = #tpu.pipeline_mode<synchronous>, transform_indices = @transform_2, window_bounds = array<i64: 1, 96>}, {transform_indices = @transform_3, window_bounds = array<i64: 16, 96>}]} {
    %c0 = arith.constant 0 : index
    %c0_0 = arith.constant 0 : index
    %0 = vector.load %arg1[%c0, %c0_0] : memref<16x48xf32, #tpu.memory_space<vmem>>, vector<16x48xf32>
    %c0_1 = arith.constant 0 : index
    %c0_2 = arith.constant 0 : index
    %1 = vector.load %arg2[%c0_1, %c0_2] : memref<48x96xf32, #tpu.memory_space<vmem>>, vector<48x96xf32>
    %cst = arith.constant dense<0.000000e+00> : vector<16x96xf32>
    %2 = tpu.matmul %0, %1, %cst {dimension_numbers = #tpu.dot_dimension_numbers<[1], [0], [0], [1], [0, 0, 1, 1], [], []>} : vector<16x48xf32>, vector<48x96xf32>, vector<16x96xf32> -> vector<16x96xf32>
    %c0_3 = arith.constant 0 : index
    %c0_4 = arith.constant 0 : index
    %3 = vector.load %arg3[%c0_3, %c0_4] : memref<1x96xf32, #tpu.memory_space<vmem>>, vector<1x96xf32>
    %4 = vector.broadcast %3 : vector<1x96xf32> to vector<16x96xf32>
    %5 = arith.addf %2, %4 : vector<16x96xf32>
    %c0_5 = arith.constant 0 : index
    %c0_6 = arith.constant 0 : index
    %6 = vector.load %arg4[%c0_5, %c0_6] : memref<16x96xf32, #tpu.memory_space<vmem>>, vector<16x96xf32>
    tpu.vector_store %arg4[%c0_5, %c0_6], %5 {strides = array<i32>} : memref<16x96xf32, #tpu.memory_space<vmem>>, vector<16x96xf32>,
    return
  }
  func.func @transform_0(%arg0: i32) -> (i32, i32) {
    %c0_i32 = arith.constant 0 : i32
    %c0_i32_0 = arith.constant 0 : i32
    return %arg0, %c0_i32 : i32, i32
  }
  func.func @transform_1(%arg0: i32) -> (i32, i32) {
    %c0_i32 = arith.constant 0 : i32
    %c0_i32_0 = arith.constant 0 : i32
    %c0_i32_1 = arith.constant 0 : i32
    return %c0_i32, %c0_i32_0 : i32, i32
  }
  func.func @transform_2(%arg0: i32) -> (i32, i32) {
    %c0_i32 = arith.constant 0 : i32
    %c0_i32_0 = arith.constant 0 : i32
    %c0_i32_1 = arith.constant 0 : i32
    return %c0_i32, %c0_i32_0 : i32, i32
  }
  func.func @transform_3(%arg0: i32) -> (i32, i32) {
    %c0_i32 = arith.constant 0 : i32
    %c0_i32_0 = arith.constant 0 : i32
    return %arg0, %c0_i32 : i32, i32
  }
}

</mosaic_0001>

<llo_original>
// kernel: tpu_custom_call.1
$region0: #{tpu_custom_call.1}
  #allocation0 [shape = 'u32[]', space=smem, size = 0x4, offset = 0x4, fixed_abs, tag = 'smem constant byte address 0x4 - core index']
  #allocation1 [shape = 'u32[144,128]{1,0:T(1,128)}', space=vmem, size = 0x12000, scoped, tag = 'internal scratch']
  %s0 = inlined_call_operand.hbm [shape: f32[32,48], index: 0, kind: input, shape index: {}]
  %s1 = inlined_call_operand.hbm [shape: f32[48,96], index: 1, kind: input, shape index: {}]
  %s2 = inlined_call_operand.vmem [shape: f32[1,96], index: 2, kind: input, shape index: {}]
  %s3 = inlined_call_operand.hbm [shape: f32[32,96], index: 3, kind: output, shape index: {}]
  %s4 = sld [smem:[#allocation0]]
  $region53: #{tpu_custom_call.1} parent=0
    _
  %s6 = ssub.s32 1, %s4
  %s7 = scalar_select 0, %s6, %s4
  $region1: #{tpu_custom_call.1} parent=0
    #allocation2 [shape = 'u8[16384]{0}', space=vmem, size = 0x4000, scoped, tag = 'input window, operand 0']
    #allocation3 [shape = 's32[2]{0}', space=sflag, size = 0x8, scoped, tag = 'scoped memory for tpu_custom_call.1']
    #allocation4 [shape = 's32[2]{0}', space=sflag, size = 0x8, scoped, tag = 'scoped memory for tpu_custom_call.1']
    #allocation5 [shape = 'u8[24576]{0}', space=vmem, size = 0x6000, scoped, tag = 'input window, operand 1, single buffered']
    #allocation6 [shape = 's32[1]{0}', space=sflag, size = 0x4, scoped, tag = 'scoped memory for tpu_custom_call.1']
    #allocation7 [shape = 'u8[16384]{0}', space=vmem, size = 0x4000, scoped, tag = 'output window, operand 0']
    %8 = vsyncpa [#allocation3], 0
    %s9 = scalar_lea.sflag [#allocation3], 1
    %10 = vsyncpa %s9, 0
    %11 = vsyncpa [#allocation6], 0
    %12 = vsyncpa [#allocation4], 0
    %s13 = scalar_lea.sflag [#allocation4], 1
    %14 = vsyncpa %s13, 0
    loop: start=0, step=1, limit=4
    $region2: #{tpu_custom_call.1} parent=1 // loop_pre_header
      _
    $region3: #{tpu_custom_call.1} parent=1 // loop_header
      %s16 = sphi 0, %s20
      %p17 = scmp.ge.s32.totalorder %s16, 4
      %s26 = sphi 0, %s28
      %s29 = sphi 0, %s26
      %s30 = sphi 0, %s29
      %s46 = sphi 0, %s30
      %s50 = sphi 0, %s50
      %s52 = sphi 0, %s50
      %s53 = sphi 0, %s52
      %s67 = sphi 0, %s53
      %s71 = sphi 0, %s71
      %s73 = sphi 0, %s71
      %s74 = sphi 0, %s73
      %s88 = sphi 0, %s74
      %s94 = sphi 0, %s96
      %s97 = sphi 0, %s94
      %s98 = sphi 0, %s97
      %s114 = sphi 0, %s98
    $region4: #{tpu_custom_call.1} parent=1 // loop_header_branch
      %19 = sbr.rel (%p17) target = $region8
    $region5: #{tpu_custom_call.1} parent=1 // loop_body
      %s21 = ssub.s32 %s16, 1
      %s22 = ssub.s32 %s16, 2
      %s23 = sadd.s32 %s16, 1
      %s24 = ssub.s32 %s16, %s23
      %p25 = scmp.eq.s32.totalorder %s24, 0
      %s27 = sadd.s32 %s26, 1
      %s28 = scalar_select %p25, %s26, %s27
      %p31 = pneg %p25
      %p32 = scmp.eq.s32.totalorder %s16, 1
      %p33 = por %p31, %p32
      %p34 = scmp.ne.s32.totalorder %s26, %s29
      %p35 = scmp.eq.s32.totalorder %s16, 0
      %p36 = por %p34, %p35
      %p37 = scmp.ne.s32.totalorder %s26, %s29
      %p38 = scmp.eq.s32.totalorder %s21, 1
      %p39 = por %p37, %p38
      %p40 = scmp.ne.s32.totalorder %s29, %s30
      %p41 = scmp.eq.s32.totalorder %s21, 0
      %p42 = por %p40, %p41
      %p43 = scmp.ne.s32.totalorder %s29, %s30
      %p44 = scmp.eq.s32.totalorder %s22, 1
      %p45 = por %p43, %p44
      %p47 = scmp.ne.s32.totalorder %s30, %s46
      %p48 = scmp.eq.s32.totalorder %s22, 0
      %p49 = por %p47, %p48
      %s51 = sadd.s32 %s50, 1
      %p54 = scmp.eq.s32.totalorder %s16, 1
      %p55 = scmp.ne.s32.totalorder %s50, %s52
      %p56 = scmp.eq.s32.totalorder %s16, 0
      %p57 = por %p55, %p56
      %p58 = scmp.ne.s32.totalorder %s50, %s52
      %p59 = scmp.eq.s32.totalorder %s21, 1
      %p60 = por %p58, %p59
      %p61 = scmp.ne.s32.totalorder %s52, %s53
      %p62 = scmp.eq.s32.totalorder %s21, 0
      %p63 = por %p61, %p62
      %p64 = scmp.ne.s32.totalorder %s52, %s53
      %p65 = scmp.eq.s32.totalorder %s22, 1
      %p66 = por %p64, %p65
      %p68 = scmp.ne.s32.totalorder %s53, %s67
      %p69 = scmp.eq.s32.totalorder %s22, 0
      %p70 = por %p68, %p69
      %s72 = sadd.s32 %s71, 1
      %p75 = scmp.eq.s32.totalorder %s16, 1
      %p76 = scmp.ne.s32.totalorder %s71, %s73
      %p77 = scmp.eq.s32.totalorder %s16, 0
      %p78 = por %p76, %p77
      %p79 = scmp.ne.s32.totalorder %s71, %s73
      %p80 = scmp.eq.s32.totalorder %s21, 1
      %p81 = por %p79, %p80
      %p82 = scmp.ne.s32.totalorder %s73, %s74
      %p83 = scmp.eq.s32.totalorder %s21, 0
      %p84 = por %p82, %p83
      %p85 = scmp.ne.s32.totalorder %s73, %s74
      %p86 = scmp.eq.s32.totalorder %s22, 1
      %p87 = por %p85, %p86
      %p89 = scmp.ne.s32.totalorder %s74, %s88
      %p90 = scmp.eq.s32.totalorder %s22, 0
      %p91 = por %p89, %p90
      %s92 = ssub.s32 %s16, %s23
      %p93 = scmp.eq.s32.totalorder %s92, 0
      %s95 = sadd.s32 %s94, 1
      %s96 = scalar_select %p93, %s94, %s95
      %p99 = pneg %p93
      %p100 = scmp.eq.s32.totalorder %s16, 1
      %p101 = por %p99, %p100
      %p102 = scmp.ne.s32.totalorder %s94, %s97
      %p103 = scmp.eq.s32.totalorder %s16, 0
      %p104 = por %p102, %p103
      %p105 = scmp.ne.s32.totalorder %s94, %s97
      %p106 = scmp.eq.s32.totalorder %s21, 1
      %p107 = por %p105, %p106
      %p108 = scmp.ne.s32.totalorder %s97, %s98
      %p109 = scmp.eq.s32.totalorder %s21, 0
      %p110 = por %p108, %p109
      %p111 = scmp.ne.s32.totalorder %s97, %s98
      %p112 = scmp.eq.s32.totalorder %s22, 1
      %p113 = por %p111, %p112
      %p115 = scmp.ne.s32.totalorder %s98, %s114
      %p116 = scmp.eq.s32.totalorder %s22, 0
      %p117 = por %p115, %p116
      %p118 = scmp.le.s32.totalorder 1, %s16
      %p119 = scmp.lt.s32.totalorder %s16, 3
      %p120 = pnand %p118, %p119
      %p121 = pneg %p120
      // Predicated region
      $region9: #{tpu_custom_call.1} parent=5 // pred_check
        _
      $region10: #{tpu_custom_call.1} parent=5 // pred_check_branch
        %123 = sbr.rel (%p120) target = $region12
      $region11: #{tpu_custom_call.1} parent=5 // pred_region
        %s124 = ssub.s32 %s16, 1
        // Predicated region
        $region13: #{tpu_custom_call.1} parent=11 // pred_check
          %p125 = pneg %p63
        $region14: #{tpu_custom_call.1} parent=11 // pred_check_branch
          %127 = sbr.rel (%p125) target = $region16
        $region15: #{tpu_custom_call.1} parent=11 // pred_region
          %s129 = ssub.s32 768, 768
          %130 = vsyncadd [#allocation6], %s129
          %s131 = sshll.u32 [#allocation5], 4
          %s132 = int_to_ptr.vmem [resolvable:$true] %s131
          %137 = dma.hbm_to_vmem [thread:$0]  %s1, 768, %s132, [#allocation6], 128, 128, 8
        $region16: #{tpu_custom_call.1} parent=11 // pred_fallthru
          _
        // Predicated region
        $region17: #{tpu_custom_call.1} parent=11 // pred_check
          %p138 = pneg %p84
        $region18: #{tpu_custom_call.1} parent=11 // pred_check_branch
          %140 = sbr.rel (%p138) target = $region20
        $region19: #{tpu_custom_call.1} parent=11 // pred_region
          _
        $region20: #{tpu_custom_call.1} parent=11 // pred_fallthru
          _
      $region12: #{tpu_custom_call.1} parent=5 // pred_fallthru
        _
      %p141 = scmp.lt.s32.totalorder %s16, 2
      // Predicated region
      $region21: #{tpu_custom_call.1} parent=5 // pred_check
        %p142 = pneg %p141
      $region22: #{tpu_custom_call.1} parent=5 // pred_check_branch
        %144 = sbr.rel (%p142) target = $region24
      $region23: #{tpu_custom_call.1} parent=5 // pred_region
        // Predicated region
        $region25: #{tpu_custom_call.1} parent=23 // pred_check
          %p145 = pneg %p36
        $region26: #{tpu_custom_call.1} parent=23 // pred_check_branch
          %147 = sbr.rel (%p145) target = $region28
        $region27: #{tpu_custom_call.1} parent=23 // pred_region
          %s148 = sand.u32 %s26, 1
          %s149 = scalar_lea.sflag [#allocation3], %s148
          %s150 = sand.u32 %s26, 1
          %s151 = smul.addr %s150, 16
          %s152 = scalar_lea.vmem [#allocation2], %s151
          %s153 = smul.u32 2, %s16
          %s155 = ssub.s32 256, 256
          %156 = vsyncadd %s149, %s155
          %s157 = smul.addr %s153, 128
          %s158 = scalar_lea.hbm %s0, %s157
          %s159 = sshll.u32 %s152, 4
          %s160 = int_to_ptr.vmem [resolvable:$true] %s159
          %165 = dma.hbm_to_vmem [thread:$0]  %s158, 256, %s160, %s149, 128, 128, 8
        $region28: #{tpu_custom_call.1} parent=23 // pred_fallthru
          _
      $region24: #{tpu_custom_call.1} parent=5 // pred_fallthru
        _
      %p166 = scmp.le.s32.totalorder 1, %s16
      %p167 = scmp.lt.s32.totalorder %s16, 3
      %p168 = pnand %p166, %p167
      %p169 = pneg %p168
      // Predicated region
      $region29: #{tpu_custom_call.1} parent=5 // pred_check
        _
      $region30: #{tpu_custom_call.1} parent=5 // pred_check_branch
        %171 = sbr.rel (%p168) target = $region32
      $region31: #{tpu_custom_call.1} parent=5 // pred_region
        %s172 = ssub.s32 %s16, 1
        %s173 = sand.u32 %s29, 1
        %s174 = scalar_lea.sflag [#allocation3], %s173
        %s175 = sand.u32 %s29, 1
        %s176 = smul.addr %s175, 16
        %s177 = scalar_lea.vmem [#allocation2], %s176
        // Predicated region
        $region33: #{tpu_custom_call.1} parent=31 // pred_check
          %p178 = pneg %p42
        $region34: #{tpu_custom_call.1} parent=31 // pred_check_branch
          %180 = sbr.rel (%p178) target = $region36
        $region35: #{tpu_custom_call.1} parent=31 // pred_region
          %181 = dma.done %s174, 256
        $region36: #{tpu_custom_call.1} parent=31 // pred_fallthru
          _
        // Predicated region
        $region37: #{tpu_custom_call.1} parent=31 // pred_check
          %p182 = pneg %p63
        $region38: #{tpu_custom_call.1} parent=31 // pred_check_branch
          %184 = sbr.rel (%p182) target = $region40
        $region39: #{tpu_custom_call.1} parent=31 // pred_region
          %185 = dma.done [#allocation6], 768
        $region40: #{tpu_custom_call.1} parent=31 // pred_fallthru
          _
        %s186 = sand.u32 %s29, 1
        %s187 = scalar_lea.sflag [#allocation3], %s186
        %s188 = sand.u32 %s29, 1
        %s189 = smul.addr %s188, 16
        %s190 = scalar_lea.vmem [#allocation2], %s189
        %p191 = pneg %p42
        %p192 = pneg %p39
        %p193 = pneg %p63
        %p194 = pneg %p60
        %p195 = pneg %p84
        %p196 = pneg %p81
        %p197 = pneg %p110
        %p198 = pneg %p107
        %s199 = sand.u32 %s97, 1
        %s200 = scalar_lea.sflag [#allocation4], %s199
        %s201 = sand.u32 %s97, 1
        %s202 = smul.addr %s201, 16
        %s203 = scalar_lea.vmem [#allocation7], %s202
        %s204 = smul.u32 2, %s21
        %s205 = smul.u32 2, %s21
        %v206 = vld [vmem:[%s177] sm:$0xff]
        %v207 = vld [vmem:[%s177 + $0x8] sm:$0xff]
        %v208 = vld [vmem:[#allocation5] sm:$0xff]
        %v209 = vld [vmem:[#allocation5 + $0x8] sm:$0xff]
        %v210 = vld [vmem:[#allocation5 + $0x10] sm:$0xff]
        %v211 = vld [vmem:[#allocation5 + $0x18] sm:$0xff]
        %v212 = vld [vmem:[#allocation5 + $0x20] sm:$0xff]
        %v213 = vld [vmem:[#allocation5 + $0x28] sm:$0xff]
        %v214 = vld [vmem:[%s2] sm:$0x1]
        %v216 = vlaneseq
        %v217 = vshrl.u32 %v216, 7
        %v218 = vsub.s32 0, %v217
        %v219 = vrot.slane %v214, %v218
        %vm221 = vcmask 392192
        %v223 = vsel %vm221, %v206, 0
        %v226 = vsel %vm221, %v207, 0
        %228 = vmatprep.subr.mxu0 0.0
        %229 = vmatpush1.msra.mxu0 %v208
        %230 = vmatprep.subr.mxu0 0.0
        %231 = vmatpush1.msra.mxu0 %v209
        %232 = vmatprep.subr.mxu0 0.0
        %233 = vmatpush1.msra.mxu0 %v210
        %234 = vmatprep.subr.mxu0 0.0
        %235 = vmatpush1.msra.mxu0 %v211
        %236 = vmatprep.subr.mxu0 0.0
        %237 = vmatpush1.msra.mxu0 %v212
        %238 = vmatprep.subr.mxu0 0.0
        %239 = vmatpush1.msra.mxu0 %v213
        %240 = vmatprep.subr.mxu0 0.0
        %241 = vmatpush1.msra.mxu0 0.0
        %242 = vmatprep.subr.mxu0 0.0
        %243 = vmatpush1.msra.mxu0 0.0
        %244 = vmatprep.subr.mxu0 0.0
        %245 = vmatpush1.msra.mxu0 0.0
        %246 = vmatprep.subr.mxu0 0.0
        %247 = vmatpush1.msra.mxu0 0.0
        %248 = vmatprep.subr.mxu0 0.0
        %249 = vmatpush1.msra.mxu0 0.0
        %250 = vmatprep.subr.mxu0 0.0
        %251 = vmatpush1.msra.mxu0 0.0
        %252 = vmatprep.subr.mxu0 0.0
        %253 = vmatpush1.msra.mxu0 0.0
        %254 = vmatprep.subr.mxu0 0.0
        %255 = vmatpush1.msra.mxu0 0.0
        %256 = vmatprep.subr.mxu0 0.0
        %257 = vmatpush1.msra.mxu0 0.0
        %258 = vmatprep.subr.mxu0 0.0
        %259 = vmatpush1.msra.mxu0 0.0
        %260 = vmatprep.subr.mxu0 0.0
        %261 = vmatpush1.msra.mxu0 0.0
        %262 = vmatprep.subr.mxu0 0.0
        %263 = vmatpush1.msra.mxu0 0.0
        %264 = vmatprep.subr.mxu0 0.0
        %265 = vmatpush1.msra.mxu0 0.0
        %266 = vmatprep.subr.mxu0 0.0
        %267 = vmatpush1.msra.mxu0 0.0
        %268 = vmatprep.subr.mxu0 0.0
        %269 = vmatpush1.msra.mxu0 0.0
        %270 = vmatprep.subr.mxu0 0.0
        %271 = vmatpush1.msra.mxu0 0.0
        %272 = vmatprep.subr.mxu0 0.0
        %273 = vmatpush1.msra.mxu0 0.0
        %274 = vmatprep.subr.mxu0 0.0
        %275 = vmatpush1.msra.mxu0 0.0
        %276 = vmatprep.subr.mxu0 0.0
        %277 = vmatpush1.msra.mxu0 0.0
        %278 = vmatprep.subr.mxu0 0.0
        %279 = vmatpush1.msra.mxu0 0.0
        %280 = vmatprep.subr.mxu0 0.0
        %281 = vmatpush1.msra.mxu0 0.0
        %282 = vmatprep.subr.mxu0 0.0
        %283 = vmatpush1.msra.mxu0 0.0
        %284 = vmatprep.subr.mxu0 0.0
        %285 = vmatpush1.msra.mxu0 0.0
        %286 = vmatprep.subr.mxu0 0.0
        %287 = vmatpush1.msra.mxu0 0.0
        %288 = vmatprep.subr.mxu0 0.0
        %289 = vmatpush1.msra.mxu0 0.0
        %290 = vmatprep.subr.mxu0 0.0
        %291 = vmatpush1.msra.mxu0 0.0
        %292 = vmatprep.mubr.f32.mxu0 0.0
        %293 = vmatmul.mubr.f32.gmra.mrb[0].mxu0 %v223
        %v294 = vpop.f32.mrb[0].mxu0
        %v295 = vadd.f32 %v219, %v294
        %v296 = vpop.f32.mrb[0].mxu0
        %297 = vmatprep.mubr.f32.mxu0 0.0
        %298 = vmatmul.mubr.f32.gmra.mrb[0].mxu0 %v226
        %v299 = vpop.f32.mrb[0].mxu0
        %v300 = vadd.f32 %v219, %v299
        %v301 = vpop.f32.mrb[0].mxu0
        %302 = vdwg.mxu0
        %vm303 = vcmask 785408
        %304 = vst.msk [vmem:[%s203] sm:$0xff] %vm303, %v295
        %305 = vst.msk [vmem:[%s203 + $0x8] sm:$0xff] %vm303, %v300
        %s306 = sand.u32 %s97, 1
        %s307 = scalar_lea.sflag [#allocation4], %s306
        %s308 = sand.u32 %s97, 1
        %s309 = smul.addr %s308, 16
        %s310 = scalar_lea.vmem [#allocation7], %s309
        // Predicated region
        $region41: #{tpu_custom_call.1} parent=31 // pred_check
          %p311 = pneg %p107
        $region42: #{tpu_custom_call.1} parent=31 // pred_check_branch
          %313 = sbr.rel (%p311) target = $region44
        $region43: #{tpu_custom_call.1} parent=31 // pred_region
          %s314 = smul.u32 2, %s21
          %s316 = ssub.s32 256, 256
          %317 = vsyncadd %s307, %s316
          %s318 = smul.addr %s314, 128
          %s319 = scalar_lea.hbm %s3, %s318
          %s320 = sshll.u32 %s310, 4
          %s321 = int_to_ptr.vmem [resolvable:$true] %s320
          %326 = dma.vmem_to_hbm [thread:$0]  %s321, 256, %s319, %s307, 128, 128, 8
        $region44: #{tpu_custom_call.1} parent=31 // pred_fallthru
          _
      $region32: #{tpu_custom_call.1} parent=5 // pred_fallthru
        _
      %p327 = scmp.le.s32.totalorder 2, %s16
      // Predicated region
      $region45: #{tpu_custom_call.1} parent=5 // pred_check
        %p328 = pneg %p327
      $region46: #{tpu_custom_call.1} parent=5 // pred_check_branch
        %330 = sbr.rel (%p328) target = $region48
      $region47: #{tpu_custom_call.1} parent=5 // pred_region
        %s331 = ssub.s32 %s16, 2
        // Predicated region
        $region49: #{tpu_custom_call.1} parent=47 // pred_check
          %p332 = pneg %p113
        $region50: #{tpu_custom_call.1} parent=47 // pred_check_branch
          %334 = sbr.rel (%p332) target = $region52
        $region51: #{tpu_custom_call.1} parent=47 // pred_region
          %s335 = sand.u32 %s98, 1
          %s336 = scalar_lea.sflag [#allocation4], %s335
          %s337 = sand.u32 %s98, 1
          %s338 = smul.addr %s337, 16
          %s339 = scalar_lea.vmem [#allocation7], %s338
          %340 = dma.done %s336, 256
        $region52: #{tpu_custom_call.1} parent=47 // pred_fallthru
          _
      $region48: #{tpu_custom_call.1} parent=5 // pred_fallthru
        _
    $region6: #{tpu_custom_call.1} parent=1 // loop_footer
      %s20 = sadd.s32 1, %s16
    $region7: #{tpu_custom_call.1} parent=1 // loop_footer_branch
      %15 = sbr.rel target = $region3
    $region8: #{tpu_custom_call.1} parent=1 // loop_exit
      _
    %341 = vsyncpa [#allocation3], 1
    %s342 = scalar_lea.sflag [#allocation3], 1
    %343 = vsyncpa %s342, 1
    %344 = vsyncpa [#allocation6], 1
    %345 = vsyncpa [#allocation4], 1
    %s346 = scalar_lea.sflag [#allocation4], 1
    %347 = vsyncpa %s346, 1

</llo_original>
